<compile_context>
chip_gen: v7x
topology: tpu7x:2x2x1
jax: 0.10.0
libtpu: 0.0.40
codegen_flags: <defaults>
</compile_context>

<pallas_src>
import jax
import jax.numpy as jnp
from jax.experimental import pallas as pl
from jax.experimental.pallas import tpu as pltpu


def _permute_kernel(x_ref, o_ref):
    # x_ref: (tc, td) tile of batch-0's (C, D) slab, native input dtype.
    # o_ref: (td, tc) float32 output tile.
    x = x_ref[...]
    if x.dtype.itemsize < 4:
        # Widen packed dtypes before the transpose: XLU then works on plain
        # 32-bit vregs instead of unpack/transpose/repack around packed bf16.
        x = x.astype(o_ref.dtype)
    xt = x.T                               # XLU tile-local transpose
    if xt.dtype != o_ref.dtype:            # static; elided for f32 inputs
        xt = xt.astype(o_ref.dtype)        # VPU cast (free slot)
    o_ref[...] = xt


def _tpu_info():
    """(vmem_capacity_bytes, multi_core) with safe fallbacks."""
    vmem = 64 << 20          # conservative default (v7x-class) if query fails
    multi_core = False
    try:
        info = pltpu.get_tpu_info()
        vmem = int(getattr(info, "vmem_capacity_bytes", vmem))
    except Exception:
        pass
    try:
        multi_core = int(getattr(jax.devices()[0], "num_cores", 1)) > 1
    except Exception:
        pass
    # v7x-class chips (64 MiB VMEM per TC) ship 2 TensorCores per chip.
    if vmem < (96 << 20):
        multi_core = True
    return vmem, multi_core


def _pick_tile(dim, max_tile, granule=128):
    """Full dim if it fits; else largest lane-dense tile <= max_tile that
    divides `dim` exactly, else one whose remainder stays >= granule."""
    if dim <= max_tile:
        return dim
    top = (max_tile // granule) * granule
    # 1) exact divisor -> no partial edge tile at all.
    t = top
    while t >= granule:
        if dim % t == 0:
            return t
        t -= granule
    # 2) remainder at least one full lane group -> edge tile still lane-dense.
    t = top
    while t >= granule:
        if dim % t >= granule:
            return t
        t -= granule
    return top


def get_block_c(x, layer_id=0, idx=0, *, use_pallas=None):
    """Pallas equivalent of GetBlock_c().forward(x, layer_id, idx).

    x: (B, C, D, 1, 1) array (any float dtype).
    returns: (D, C) float32 array with out[j, c] = x[0, c, j, 0, 0].
    NOTE: the PyTorch reference materializes Python floats (float64); TPU
    kernels produce float32 here.
    """
    del layer_id, idx  # unused by the reference
    B, C, D, H, W = x.shape
    assert H == 1 and W == 1, "reference semantics require H == W == 1"

    # Free bitcast: drop the trailing singleton spatial dims (no HBM copy).
    x3 = x.reshape(B, C, D)

    if use_pallas is None:
        # Require a non-trivial slab AND a lane-dense output (C >= 128) AND a
        # non-degenerate sublane extent (D >= 8); otherwise masked partial
        # stores / launch overhead make XLA's fused slice+transpose faster.
        use_pallas = (C >= 128) and (D >= 8) and (C * D >= 128 * 128)
    if not use_pallas:
        return jnp.transpose(x3[0], (1, 0)).astype(jnp.float32)

    vmem_bytes, multi_core = _tpu_info()
    big_vmem = vmem_bytes >= (96 << 20)          # v5e / v6e (128 MiB VMEM)
    max_tc = 2048 if big_vmem else 1024          # output lane axis
    max_td = 1024                                # input lane axis

    tc = _pick_tile(C, max_tc)   # C-tile: lane dim of the output
    td = _pick_tile(D, max_td)   # D-tile: lane dim of the input

    grid = (pl.cdiv(D, td), pl.cdiv(C, tc))

    # v7x megacore: a single-step grid would idle the second TensorCore.
    if multi_core and grid[0] * grid[1] < 2:
        if D >= 256:
            td = max(128, (D // 2) // 128 * 128)
        elif C >= 256:
            tc = max(128, (C // 2) // 128 * 128)
        grid = (pl.cdiv(D, td), pl.cdiv(C, tc))

    # Explicit VMEM budget: double-buffered input + output tiles, plus the
    # f32 transpose temporary materialized before the store, plus headroom.
    in_tile = tc * td * x.dtype.itemsize
    out_tile = tc * td * 4
    need = 2 * (in_tile + out_tile) + out_tile + (2 << 20)
    cap = (48 << 20) if big_vmem else (30 << 20)
    vmem_limit = int(min(max(need, 4 << 20), cap))

    # TODO(synk): sweep pipeline_mode=pl.Buffered(3) on the input BlockSpec on
    # v7x once tiles are enlarged (expected low single-digit %; measure first).
    out = pl.pallas_call(
        _permute_kernel,
        out_shape=jax.ShapeDtypeStruct((D, C), jnp.float32),
        grid=grid,
        in_specs=[
            pl.BlockSpec(
                (pl.Squeezed(), tc, td),     # batch dim squeezed -> kernel sees (tc, td)
                lambda i, j: (0, j, i),      # always batch 0; (C-tile j, D-tile i)
            )
        ],
        out_specs=pl.BlockSpec((td, tc), lambda i, j: (i, j)),
        compiler_params=pltpu.CompilerParams(
            dimension_semantics=("parallel", "parallel"),
            vmem_limit_bytes=vmem_limit,
        ),
    )(x3)
    return out


if __name__ == "__main__":
    key = jax.random.PRNGKey(0)

    # Small shapes consistent with the module: (B, C, D, H, W) with H = W = 1.
    B, C, D = 2, 8, 16
    x = jax.random.normal(key, (B, C, D, 1, 1), dtype=jnp.float32)

    # Force the Pallas path so the kernel itself is exercised at this size.
    out = jax.block_until_ready(get_block_c(x, layer_id=0, idx=0, use_pallas=True))
    ref = jnp.transpose(x[0, :, :, 0, 0], (1, 0)).astype(jnp.float32)
    assert out.shape == (D, C), out.shape
    assert jnp.array_equal(out, ref), "mismatch vs reference (f32)"

    # bf16 input exercises the pre-transpose widen and a lane-width D.
    x2 = jax.random.normal(jax.random.PRNGKey(0), (2, 16, 256, 1, 1),
                           dtype=jnp.bfloat16)
    out2 = jax.block_until_ready(get_block_c(x2, 0, 0, use_pallas=True))
    ref2 = jnp.transpose(x2[0, :, :, 0, 0], (1, 0)).astype(jnp.float32)
    assert out2.shape == (256, 16), out2.shape
    assert jnp.array_equal(out2, ref2), "mismatch vs reference (bf16)"

    # Lane-dense C exercises the megacore grid-split path on multi-TC chips
    # (and the default-heuristic Pallas path) while staying small.
    x3 = jax.random.normal(jax.random.PRNGKey(1), (2, 256, 32, 1, 1),
                           dtype=jnp.float32)
    out3 = jax.block_until_ready(get_block_c(x3, 0, 0, use_pallas=True))
    ref3 = jnp.transpose(x3[0, :, :, 0, 0], (1, 0)).astype(jnp.float32)
    assert out3.shape == (32, 256), out3.shape
    assert jnp.array_equal(out3, ref3), "mismatch vs reference (f32, tiled)"

    print("KERNEL_OK")
</pallas_src>

<mosaic_0001>
module attributes {stable_mosaic.version = 11 : i64} {
  func.func @_permute_kernel(%arg0: i32, %arg1: i32, %arg2: memref<1x8x16xf32, #tpu.memory_space<vmem>>, %arg3: memref<16x8xf32, #tpu.memory_space<vmem>>) attributes {dimension_semantics = [#tpu.dimension_semantics<parallel>, #tpu.dimension_semantics<parallel>], iteration_bounds = array<i64: 1, 1>, scalar_prefetch = 0 : i64, scratch_operands = 0 : i64, tpu.core_type = #tpu.core_type<tc>, window_params = [{transform_indices = @transform_0, window_bounds = array<i64: 1, 8, 16>}, {transform_indices = @transform_1, window_bounds = array<i64: 16, 8>}]} {
    %c0 = arith.constant 0 : index
    %c0_0 = arith.constant 0 : index
    %c0_1 = arith.constant 0 : index
    %0 = vector.load %arg2[%c0, %c0_0, %c0_1] : memref<1x8x16xf32, #tpu.memory_space<vmem>>, vector<1x8x16xf32>
    %1 = vector.shape_cast %0 : vector<1x8x16xf32> to vector<8x16xf32>
    %2 = tpu.transpose %1, [1, 0] : vector<8x16xf32> -> vector<16x8xf32>
    %c0_2 = arith.constant 0 : index
    %c0_3 = arith.constant 0 : index
    %3 = vector.load %arg3[%c0_2, %c0_3] : memref<16x8xf32, #tpu.memory_space<vmem>>, vector<16x8xf32>
    tpu.vector_store %arg3[%c0_2, %c0_3], %2 {strides = array<i32>} : memref<16x8xf32, #tpu.memory_space<vmem>>, vector<16x8xf32>,
    return
  }
  func.func @transform_0(%arg0: i32, %arg1: i32) -> (i32, i32, i32) {
    %c0_i32 = arith.constant 0 : i32
    %c0_i32_0 = arith.constant 0 : i32
    return %c0_i32, %arg1, %arg0 : i32, i32, i32
  }
  func.func @transform_1(%arg0: i32, %arg1: i32) -> (i32, i32) {
    %c0_i32 = arith.constant 0 : i32
    return %arg0, %arg1 : i32, i32
  }
}

</mosaic_0001>

<llo_original>
// kernel: tpu_custom_call.1
$region0: #{tpu_custom_call.1}
  #allocation0 [shape = 'u32[]', space=smem, size = 0x4, offset = 0x4, fixed_abs, tag = 'smem constant byte address 0x4 - core index']
  #allocation1 [shape = 'u32[144,128]{1,0:T(1,128)}', space=vmem, size = 0x12000, scoped, tag = 'internal scratch']
  %s0 = inlined_call_operand.hbm [shape: f32[2,8,16], index: 0, kind: input, shape index: {}]
  %s1 = inlined_call_operand.vmem [shape: f32[16,8], index: 1, kind: output, shape index: {}]
  %s2 = sld [smem:[#allocation0]]
  $region18: #{tpu_custom_call.1} parent=0
    _
  %s4 = ssub.s32 1, %s2
  %s5 = scalar_select 0, %s4, %s2
  $region1: #{tpu_custom_call.1} parent=0
    #allocation2 [shape = 'u8[4096]{0}', space=vmem, size = 0x1000, scoped, tag = 'input window, operand 0, single buffered']
    #allocation3 [shape = 's32[1]{0}', space=sflag, size = 0x4, scoped, tag = 'scoped memory for tpu_custom_call.1']
    %6 = vsyncpa [#allocation3], 0
    // Predicated region
    $region2: #{tpu_custom_call.1} parent=1 // pred_check
      _
    $region3: #{tpu_custom_call.1} parent=1 // pred_check_branch
      %8 = sbr.rel (0) target = $region5
    $region4: #{tpu_custom_call.1} parent=1 // pred_region
      %s10 = ssub.s32 128, 128
      %11 = vsyncadd [#allocation3], %s10
      %s13 = sshll.u32 [#allocation2], 4
      %s14 = int_to_ptr.vmem [resolvable:$true] %s13
      %16 = dma.hbm_to_vmem [thread:$0]  %s0, 128, %s14, [#allocation3]
    $region5: #{tpu_custom_call.1} parent=1 // pred_fallthru
      _
    // Predicated region
    $region6: #{tpu_custom_call.1} parent=1 // pred_check
      _
    $region7: #{tpu_custom_call.1} parent=1 // pred_check_branch
      %18 = sbr.rel (0) target = $region9
    $region8: #{tpu_custom_call.1} parent=1 // pred_region
      %19 = dma.done [#allocation3], 128
    $region9: #{tpu_custom_call.1} parent=1 // pred_fallthru
      _
    %v20 = vld [vmem:[#allocation2] sm:$0xff]
    %21 = vxpose.xlu0.b32.start [1/16] %v20, 128
    %22 = vxpose.xlu0.b32.cont [2/16] 0.0, 128
    %23 = vxpose.xlu0.b32.cont [3/16] 0.0, 128
    %24 = vxpose.xlu0.b32.cont [4/16] 0.0, 128
    %25 = vxpose.xlu0.b32.cont [5/16] 0.0, 128
    %26 = vxpose.xlu0.b32.cont [6/16] 0.0, 128
    %27 = vxpose.xlu0.b32.cont [7/16] 0.0, 128
    %28 = vxpose.xlu0.b32.cont [8/16] 0.0, 128
    %29 = vxpose.xlu0.b32.cont [9/16] 0.0, 128
    %30 = vxpose.xlu0.b32.cont [10/16] 0.0, 128
    %31 = vxpose.xlu0.b32.cont [11/16] 0.0, 128
    %32 = vxpose.xlu0.b32.cont [12/16] 0.0, 128
    %33 = vxpose.xlu0.b32.cont [13/16] 0.0, 128
    %34 = vxpose.xlu0.b32.cont [14/16] 0.0, 128
    %35 = vxpose.xlu0.b32.cont [15/16] 0.0, 128
    %36 = vxpose.xlu0.b32.end [16/16] 0.0, 128
    %v37 = vpop.trf.xlu0
    %v38 = vpop.trf.xlu0
    %v39 = vpop.trf.xlu0
    %v40 = vpop.trf.xlu0
    %v41 = vpop.trf.xlu0
    %v42 = vpop.trf.xlu0
    %v43 = vpop.trf.xlu0
    %v44 = vpop.trf.xlu0
    %v45 = vpop.trf.xlu0
    %v46 = vpop.trf.xlu0
    %v47 = vpop.trf.xlu0
    %v48 = vpop.trf.xlu0
    %v49 = vpop.trf.xlu0
    %v50 = vpop.trf.xlu0
    %v51 = vpop.trf.xlu0
    %v52 = vpop.trf.xlu0
    %vm53 = vcmask 64512
    %54 = vst.msk [vmem:[%s1] sm:$0xff] %vm53, %v37
    %55 = vst.msk [vmem:[%s1 + $0x8] sm:$0xff] %vm53, %v38
    // Predicated region
    $region10: #{tpu_custom_call.1} parent=1 // pred_check
      _
    $region11: #{tpu_custom_call.1} parent=1 // pred_check_branch
      %57 = sbr.rel (0) target = $region13
    $region12: #{tpu_custom_call.1} parent=1 // pred_region
      _
    $region13: #{tpu_custom_call.1} parent=1 // pred_fallthru
      _
    // Predicated region
    $region14: #{tpu_custom_call.1} parent=1 // pred_check
      _
    $region15: #{tpu_custom_call.1} parent=1 // pred_check_branch
      %59 = sbr.rel (0) target = $region17
    $region16: #{tpu_custom_call.1} parent=1 // pred_region
      _
    $region17: #{tpu_custom_call.1} parent=1 // pred_fallthru
      _
    %60 = vsyncpa [#allocation3], 1

</llo_original>
